<compile_context>
chip_gen: v7x
topology: tpu7x:2x2x1
jax: 0.10.0
libtpu: 0.0.40
codegen_flags: <defaults>
</compile_context>

<pallas_src>
from functools import partial

import jax
import jax.numpy as jnp
from jax.experimental import pallas as pl
from jax.experimental.pallas import tpu as pltpu


def fm_kernel(x_ref, o_ref, *, num_fields, emb_dim):
    # x_ref: (TB, F*D) tile in VMEM (native dtype); o_ref: (1, 1, TB) f32.
    x = x_ref[...].astype(jnp.float32)                       # (TB, F*D)

    # Field sum via static lane slices (VPU adds, no sublane/XLU reduction).
    s = x[:, 0:emb_dim]
    for f in range(1, num_fields):
        s = s + x[:, f * emb_dim:(f + 1) * emb_dim]          # (TB, D)

    # Fused final reductions: never materialize (TB, D) temporaries separately.
    sq_of_sum = jnp.sum(s * s, axis=-1)                      # (TB,)
    sum_of_sq = jnp.sum(x * x, axis=-1)                      # (TB,)  (= sum over F and D)
    cross = 0.5 * (sq_of_sum - sum_of_sq)                    # (TB,)

    o_ref[...] = cross[None, None, :]                        # lane-dense row store


def fm_forward(x, *, target_block_bytes=4 * 1024 * 1024):
    """x: (B, F, D) -> (B, 1). Batch-tiled, double-buffered, lane-dense layout."""
    B, F, D = x.shape
    FD = F * D
    itemsize = jnp.dtype(x.dtype).itemsize

    # Lane-dense view of each batch row: one contiguous F*D row.
    x2 = x.reshape(B, FD)

    # Pick a batch tile so each input block is a few MiB (multiple of 8 sublanes),
    # capped at the (8-padded) batch size. Double-buffered blocks stay well under
    # the scoped VMEM limit on v5e/v6e/v7x.
    bytes_per_row = FD * itemsize
    tb = max(8, target_block_bytes // bytes_per_row)
    tb = (tb // 8) * 8
    b_pad8 = ((B + 7) // 8) * 8
    tb = int(min(tb, b_pad8))

    num_blocks = (B + tb - 1) // tb
    Bp = num_blocks * tb
    if Bp != B:
        # Zero-padded rows contribute cross = 0 and are sliced off below.
        x2 = jnp.pad(x2, ((0, Bp - B), (0, 0)))

    kernel = partial(fm_kernel, num_fields=F, emb_dim=D)

    cost = pl.CostEstimate(
        flops=3 * Bp * FD,
        transcendentals=0,
        bytes_accessed=Bp * FD * itemsize + Bp * 4,
    )

    out = pl.pallas_call(
        kernel,
        out_shape=jax.ShapeDtypeStruct((num_blocks, 1, tb), jnp.float32),
        grid_spec=pltpu.PrefetchScalarGridSpec(
            num_scalar_prefetch=0,
            grid=(num_blocks,),
            in_specs=[pl.BlockSpec((tb, FD), lambda i: (i, 0))],
            out_specs=pl.BlockSpec((1, 1, tb), lambda i: (i, 0, 0)),
        ),
        compiler_params=pltpu.CompilerParams(
            dimension_semantics=("parallel",),
            vmem_limit_bytes=32 * 1024 * 1024,
        ),
        cost_estimate=cost,
    )(x2)

    return out.reshape(Bp)[:B].reshape(B, 1).astype(x.dtype)


def fm_reference(x):
    xf = x.astype(jnp.float32)
    square_of_sum = jnp.sum(xf, axis=1) ** 2
    sum_of_square = jnp.sum(xf ** 2, axis=1)
    cross = 0.5 * jnp.sum(square_of_sum - sum_of_square, axis=1, keepdims=True)
    return cross.astype(x.dtype)


if __name__ == "__main__":
    key = jax.random.PRNGKey(0)

    # Small test: batch=8, fields=4, embedding dim=32  (F*D = 128 -> one lane row).
    B, F, D = 8, 4, 32
    x = jax.random.normal(key, (B, F, D), dtype=jnp.float32)

    out = fm_forward(x)
    jax.block_until_ready(out)
    ref = fm_reference(x)
    assert out.shape == (B, 1), out.shape
    assert jnp.allclose(out, ref, atol=1e-4, rtol=1e-4), (out, ref)

    # Non-divisible batch exercises the padded tail block.
    B2 = 10
    x2 = jax.random.normal(jax.random.PRNGKey(1), (B2, F, D), dtype=jnp.float32)
    out2 = fm_forward(x2)
    jax.block_until_ready(out2)
    ref2 = fm_reference(x2)
    assert out2.shape == (B2, 1), out2.shape
    assert jnp.allclose(out2, ref2, atol=1e-4, rtol=1e-4), (out2, ref2)

    print("KERNEL_OK")
</pallas_src>

<mosaic_0001>
module attributes {stable_mosaic.version = 11 : i64} {
  func.func @fm_kernel(%arg0: i32, %arg1: memref<8x128xf32, #tpu.memory_space<vmem>>, %arg2: memref<1x1x8xf32, #tpu.memory_space<vmem>>) attributes {dimension_semantics = [#tpu.dimension_semantics<parallel>], iteration_bounds = array<i64: 1>, scalar_prefetch = 0 : i64, scratch_operands = 0 : i64, tpu.core_type = #tpu.core_type<tc>, window_params = [{transform_indices = @transform_0, window_bounds = array<i64: 8, 128>}, {transform_indices = @transform_1, window_bounds = array<i64: 1, 1, 8>}]} {
    %c0 = arith.constant 0 : index
    %c0_0 = arith.constant 0 : index
    %0 = vector.load %arg1[%c0, %c0_0] : memref<8x128xf32, #tpu.memory_space<vmem>>, vector<8x128xf32>
    %1 = vector.extract_strided_slice %0 {offsets = [0, 0], sizes = [8, 32], strides = [1, 1]} : vector<8x128xf32> to vector<8x32xf32>
    %2 = vector.extract_strided_slice %0 {offsets = [0, 32], sizes = [8, 32], strides = [1, 1]} : vector<8x128xf32> to vector<8x32xf32>
    %3 = arith.addf %1, %2 : vector<8x32xf32>
    %4 = vector.extract_strided_slice %0 {offsets = [0, 64], sizes = [8, 32], strides = [1, 1]} : vector<8x128xf32> to vector<8x32xf32>
    %5 = arith.addf %3, %4 : vector<8x32xf32>
    %6 = vector.extract_strided_slice %0 {offsets = [0, 96], sizes = [8, 32], strides = [1, 1]} : vector<8x128xf32> to vector<8x32xf32>
    %7 = arith.addf %5, %6 : vector<8x32xf32>
    %8 = arith.mulf %7, %7 : vector<8x32xf32>
    %cst = arith.constant dense<0.000000e+00> : vector<8xf32>
    %9 = vector.multi_reduction <add>, %8, %cst [1] : vector<8x32xf32> to vector<8xf32>
    %10 = arith.mulf %0, %0 : vector<8x128xf32>
    %cst_1 = arith.constant dense<0.000000e+00> : vector<8xf32>
    %11 = vector.multi_reduction <add>, %10, %cst_1 [1] : vector<8x128xf32> to vector<8xf32>
    %12 = arith.subf %9, %11 : vector<8xf32>
    %cst_2 = arith.constant 5.000000e-01 : f32
    %13 = vector.broadcast %cst_2 : f32 to vector<8xf32>
    %14 = arith.mulf %13, %12 : vector<8xf32>
    %15 = vector.shape_cast %14 : vector<8xf32> to vector<1x1x8xf32>
    %c0_3 = arith.constant 0 : index
    %c0_4 = arith.constant 0 : index
    %c0_5 = arith.constant 0 : index
    %16 = vector.load %arg2[%c0_3, %c0_4, %c0_5] : memref<1x1x8xf32, #tpu.memory_space<vmem>>, vector<1x1x8xf32>
    tpu.vector_store %arg2[%c0_3, %c0_4, %c0_5], %15 {strides = array<i32>} : memref<1x1x8xf32, #tpu.memory_space<vmem>>, vector<1x1x8xf32>,
    return
  }
  func.func @transform_0(%arg0: i32) -> (i32, i32) {
    %c0_i32 = arith.constant 0 : i32
    %c0_i32_0 = arith.constant 0 : i32
    return %arg0, %c0_i32 : i32, i32
  }
  func.func @transform_1(%arg0: i32) -> (i32, i32, i32) {
    %c0_i32 = arith.constant 0 : i32
    %c0_i32_0 = arith.constant 0 : i32
    %c0_i32_1 = arith.constant 0 : i32
    return %arg0, %c0_i32, %c0_i32_0 : i32, i32, i32
  }
}

</mosaic_0001>

<llo_original>
// kernel: tpu_custom_call.1
$region0: #{tpu_custom_call.1}
  #allocation0 [shape = 'u32[]', space=smem, size = 0x4, offset = 0x4, fixed_abs, tag = 'smem constant byte address 0x4 - core index']
  #allocation1 [shape = 'u32[144,128]{1,0:T(1,128)}', space=vmem, size = 0x12000, scoped, tag = 'internal scratch']
  %s0 = inlined_call_operand.hbm [shape: f32[8,128], index: 0, kind: input, shape index: {}]
  %s1 = inlined_call_operand.hbm [shape: f32[1,1,8], index: 1, kind: output, shape index: {}]
  %s2 = sld [smem:[#allocation0]]
  $region18: #{tpu_custom_call.1} parent=0
    _
  %s4 = ssub.s32 1, %s2
  %s5 = scalar_select 0, %s4, %s2
  $region1: #{tpu_custom_call.1} parent=0
    #allocation2 [shape = 'u8[4096]{0}', space=vmem, size = 0x1000, scoped, tag = 'input window, operand 0, single buffered']
    #allocation3 [shape = 's32[1]{0}', space=sflag, size = 0x4, scoped, tag = 'scoped memory for tpu_custom_call.1']
    #allocation4 [shape = 's32[1]{0}', space=sflag, size = 0x4, scoped, tag = 'scoped memory for tpu_custom_call.1']
    #allocation5 [shape = 'u8[512]{0}', space=vmem, size = 0x400, scoped, tag = 'output window, operand 0, single buffered']
    %6 = vsyncpa [#allocation3], 0
    %7 = vsyncpa [#allocation4], 0
    // Predicated region
    $region2: #{tpu_custom_call.1} parent=1 // pred_check
      _
    $region3: #{tpu_custom_call.1} parent=1 // pred_check_branch
      %9 = sbr.rel (0) target = $region5
    $region4: #{tpu_custom_call.1} parent=1 // pred_region
      %s11 = ssub.s32 128, 128
      %12 = vsyncadd [#allocation3], %s11
      %s14 = sshll.u32 [#allocation2], 4
      %s15 = int_to_ptr.vmem [resolvable:$true] %s14
      %17 = dma.hbm_to_vmem [thread:$0]  %s0, 128, %s15, [#allocation3]
    $region5: #{tpu_custom_call.1} parent=1 // pred_fallthru
      _
    // Predicated region
    $region6: #{tpu_custom_call.1} parent=1 // pred_check
      _
    $region7: #{tpu_custom_call.1} parent=1 // pred_check_branch
      %19 = sbr.rel (0) target = $region9
    $region8: #{tpu_custom_call.1} parent=1 // pred_region
      %20 = dma.done [#allocation3], 128
    $region9: #{tpu_custom_call.1} parent=1 // pred_fallthru
      _
    %v21 = vld [vmem:[#allocation2] sm:$0xff]
    %23 = vrot.lane.b32.xlu0 %v21, 96
    %v24 = vpop.permute.xlu0 %23
    %v26 = vadd.f32 %v21, %v24
    %27 = vrot.lane.b32.xlu0 %v21, 64
    %v28 = vpop.permute.xlu0 %27
    %v30 = vadd.f32 %v26, %v28
    %31 = vrot.lane.b32.xlu0 %v21, 32
    %v32 = vpop.permute.xlu0 %31
    %v34 = vadd.f32 %v30, %v32
    %v35 = vmul.f32 %v34, %v34
    %vm36 = vcmask 261120
    %v37 = vsel %vm36, %v35, 0.0
    %38 = vadd.xlane.f32.xlu0 %v37
    %v39 = vpop.xlane.xlu0 %38
    %v40 = vmul.f32 %v21, %v21
    %41 = vadd.xlane.f32.xlu0 %v40
    %v42 = vpop.xlane.xlu0 %41
    %v43 = vsub.f32 %v39, %v42
    %v44 = vmul.f32 %v43, 0.5
    %v46 = vlaneseq
    %v47 = vand.u32 %v46, 127
    %v48 = vlaneseq
    %v49 = vshrl.u32 %v48, 7
    %v50 = vsub.s32 %v47, %v49
    %v51 = vrot.slane %v44, %v50
    %vm53 = vcmask 57344
    %54 = vst.msk [vmem:[#allocation5] sm:$0x1] %vm53, %v51
    // Predicated region
    $region10: #{tpu_custom_call.1} parent=1 // pred_check
      _
    $region11: #{tpu_custom_call.1} parent=1 // pred_check_branch
      %56 = sbr.rel (0) target = $region13
    $region12: #{tpu_custom_call.1} parent=1 // pred_region
      %s58 = ssub.s32 16, 16
      %59 = vsyncadd [#allocation4], %s58
      %s61 = sshll.u32 [#allocation5], 4
      %s62 = int_to_ptr.vmem [resolvable:$true] %s61
      %64 = dma.vmem_to_hbm [thread:$0]  %s62, 16, %s1, [#allocation4]
    $region13: #{tpu_custom_call.1} parent=1 // pred_fallthru
      _
    // Predicated region
    $region14: #{tpu_custom_call.1} parent=1 // pred_check
      _
    $region15: #{tpu_custom_call.1} parent=1 // pred_check_branch
      %66 = sbr.rel (0) target = $region17
    $region16: #{tpu_custom_call.1} parent=1 // pred_region
      %67 = dma.done [#allocation4], 16
    $region17: #{tpu_custom_call.1} parent=1 // pred_fallthru
      _
    %68 = vsyncpa [#allocation3], 1
    %69 = vsyncpa [#allocation4], 1

</llo_original>
